<compile_context>
chip_gen: v6e
topology: v6e:2x2x1
jax: 0.10.0
libtpu: 0.0.40
codegen_flags: <defaults>
</compile_context>

<pallas_src>
import functools

import jax
import jax.numpy as jnp
from jax import lax
from jax.experimental import pallas as pl
from jax.experimental.pallas import tpu as pltpu


_VMEM_LIMIT = 48 * 1024 * 1024   # <= ~48 MiB: safe on v7x (64 MiB/TC), above the
                                 # 32 MiB scoped default on v5e/v6e.
_VMEM_BUDGET = 40 * 1024 * 1024  # working budget used to derive tile sizes.


# --------------------- conv (+ fused prev BN/ReLU) + partial BN stats -------

def _conv_stats_kernel(x_ref, a_ref, b_ref, scale_ref, shift_ref,
                       y_ref, stats_ref, *, HBLK, H, K, fuse_prologue):
    # x_ref:     (1, H+K-1, W*Cin)   bf16  H-padded, lane-flattened activation
    # a_ref:     (K, W*Cin, W*Cout)  bf16  per-kh banded weight matrices
    # b_ref:     (1, W*Cout)         f32   conv bias tiled across w
    # scale_ref: (1, W*Cin)          f32   previous layer's fused BN scale
    # shift_ref: (1, W*Cin)          f32   previous layer's fused BN shift
    # y_ref:     (1, HBLK, W*Cout)   bf16  raw conv output tile (lane dense)
    # stats_ref: (1, 1, 2, W*Cout)   f32   per-tile [sum ; sum of squares]
    h = pl.program_id(1)
    row0 = pl.multiple_of(h * HBLK, HBLK)
    xw = x_ref[0, pl.ds(row0, HBLK + K - 1), :]          # (HBLK+K-1, W*Cin)

    if fuse_prologue:
        # Fused BatchNorm(scale/shift) + ReLU of the PREVIOUS layer, applied
        # to the raw bf16 tile right after load (f32 VPU math: v5e-safe).
        xf = jnp.maximum(
            xw.astype(jnp.float32) * scale_ref[...] + shift_ref[...], 0.0)
        # Re-zero the H-halo rows so 'same' padding sees zeros post-BN/ReLU.
        g = row0 + lax.broadcasted_iota(jnp.int32, (HBLK + K - 1, 1), 0)
        xf = jnp.where((g >= 1) & (g <= H), xf, 0.0)
        xw = xf.astype(jnp.bfloat16)

    # K row-shifted banded matmuls: the conv stays in the lane-flattened
    # layout end-to-end -> no im2col reshape / concat relayouts at all.
    acc = jnp.dot(xw[0:HBLK, :], a_ref[0], preferred_element_type=jnp.float32)
    for kh in range(1, K):
        acc = acc + jnp.dot(xw[kh:kh + HBLK, :], a_ref[kh],
                            preferred_element_type=jnp.float32)
    acc = acc + b_ref[...]                               # (HBLK, W*Cout) f32

    y_ref[0] = acc.astype(y_ref.dtype)                   # unmasked lane-dense vst

    # Per-tile BatchNorm partial sums (W-fold + global reduce in the wrapper).
    s = jnp.sum(acc, axis=0, keepdims=True)
    ss = jnp.sum(acc * acc, axis=0, keepdims=True)
    stats_ref[0, 0] = jnp.concatenate([s, ss], axis=0)   # (2, W*Cout)


# --------------------- final fused BatchNorm (scale/shift) + ReLU -----------

def _bn_relu_kernel(y_ref, scale_ref, shift_ref, o_ref):
    # f32 VPU math (v5e-safe); one FMA + max per element on lane-dense tiles.
    o_ref[...] = jnp.maximum(
        y_ref[...].astype(jnp.float32) * scale_ref[...] + shift_ref[...], 0.0)


# --------------------------- host-side helpers ------------------------------

def _banded_weights(w_oihw, W):
    """(Cout,Cin,K,K) torch-layout weights -> (K, W*Cin, W*Cout) banded matrices.

    A[kh][wi*Cin+ci, w*Cout+co] = w[co, ci, kh, kw]  with  wi = w + kw - K//2,
    so in the lane-flattened (row, W*C) layout  conv(x)[r] = sum_kh x[r+kh] @ A[kh].
    'same' W-padding is folded into the band structure (no W padding needed).
    """
    Cout, Cin, KH, KW = w_oihw.shape
    w_hwio = jnp.transpose(w_oihw, (2, 3, 1, 0)).astype(jnp.float32)
    mats = []
    for kh in range(KH):
        a = jnp.zeros((W * Cin, W * Cout), jnp.float32)
        for kw in range(KW):
            shift = jnp.eye(W, W, k=(KW // 2) - kw, dtype=jnp.float32)
            a = a + jnp.kron(shift, w_hwio[kh, kw])
        mats.append(a)
    return jnp.stack(mats).astype(jnp.bfloat16)


def _pick_hblk(H, W, Cin, Cout, K, budget=_VMEM_BUDGET):
    """Largest HBLK (divisor of H, multiple of 8 or == H) fitting the budget."""
    cands = [h for h in range(H, 0, -1) if H % h == 0 and (h % 8 == 0 or h == H)]
    li, lo = W * Cin, W * Cout
    fixed = 2 * ((H + K - 1) * li * 2 + K * li * lo * 2)   # dbl-buffered in + weights
    for h in cands:
        var = 2 * h * lo * 2 + (h + K - 1) * li * 4 + 2 * h * lo * 4
        if fixed + var <= budget:
            return h
    return cands[-1]


def _pick_rblk(rows, lane_width, budget=_VMEM_BUDGET):
    """Byte-budget-aware row block for the elementwise pass (>=2 blocks if possible)."""
    if rows % 8 != 0:
        return rows
    per_row = lane_width * (2 + 4) * 2 + 64                # bf16 in + f32 out, x2 bufs
    cap = max(8, min(rows, (budget // per_row) // 8 * 8))
    if rows >= 16:
        cap = min(cap, max(8, (rows // 2) // 8 * 8))       # keep both v7x TCs busy
    blk = cap
    while rows % blk:
        blk -= 8
    return max(blk, 8)


# --------------------------- one conv pass (Pallas) -------------------------

def _conv_pass(x_flat, w_oihw, bias, *, H, W, Cin, prev_scale, prev_shift):
    """Conv2d(3x3,'same') on an H-padded lane-flattened bf16 activation.

    If prev_scale/prev_shift are given, the previous layer's BatchNorm + ReLU
    are fused into this kernel's prologue.  Returns the raw bf16 conv output
    (N, H, W*Cout) and its per-channel (mean, var) batch statistics.
    """
    N = x_flat.shape[0]
    Cout, Cin_w, K, _ = w_oihw.shape
    assert Cin_w == Cin
    fuse = prev_scale is not None

    a_bands = _banded_weights(w_oihw, W)                        # (K, W*Cin, W*Cout)
    b_row = jnp.tile(bias.astype(jnp.float32), W).reshape(1, W * Cout)
    if fuse:
        scale_row = jnp.tile(prev_scale, W).reshape(1, W * Cin)
        shift_row = jnp.tile(prev_shift, W).reshape(1, W * Cin)
    else:
        scale_row = jnp.ones((1, W * Cin), jnp.float32)
        shift_row = jnp.zeros((1, W * Cin), jnp.float32)

    HBLK = _pick_hblk(H, W, Cin, Cout, K)
    HT = H // HBLK

    kernel = functools.partial(_conv_stats_kernel, HBLK=HBLK, H=H, K=K,
                               fuse_prologue=fuse)

    y, stats = pl.pallas_call(
        kernel,
        out_shape=(jax.ShapeDtypeStruct((N, H, W * Cout), jnp.bfloat16),
                   jax.ShapeDtypeStruct((N, HT, 2, W * Cout), jnp.float32)),
        grid=(N, HT),
        in_specs=[
            pl.BlockSpec((1, H + K - 1, W * Cin), lambda n, h: (n, 0, 0)),
            pl.BlockSpec((K, W * Cin, W * Cout), lambda n, h: (0, 0, 0)),
            pl.BlockSpec((1, W * Cout), lambda n, h: (0, 0)),
            pl.BlockSpec((1, W * Cin), lambda n, h: (0, 0)),
            pl.BlockSpec((1, W * Cin), lambda n, h: (0, 0)),
        ],
        out_specs=(
            pl.BlockSpec((1, HBLK, W * Cout), lambda n, h: (n, h, 0)),
            pl.BlockSpec((1, 1, 2, W * Cout), lambda n, h: (n, h, 0, 0)),
        ),
        compiler_params=pltpu.CompilerParams(
            dimension_semantics=("parallel", "parallel"),
            vmem_limit_bytes=_VMEM_LIMIT),
    )(x_flat, a_bands, b_row, scale_row, shift_row)

    # Global training-mode BN statistics from the tiny per-tile partial sums.
    m_total = float(N * H * W)
    sums = jnp.sum(stats, axis=(0, 1)).reshape(2, W, Cout).sum(axis=1)   # (2, Cout)
    mean = sums[0] / m_total
    var = jnp.maximum(sums[1] / m_total - mean * mean, 0.0)   # biased, as PyTorch
    return y, mean, var


def _bn_relu_pass(y2d, scale, shift, *, W):
    rows, wc = y2d.shape
    scale_row = jnp.tile(scale, W).reshape(1, wc)
    shift_row = jnp.tile(shift, W).reshape(1, wc)
    rblk = _pick_rblk(rows, wc)
    return pl.pallas_call(
        _bn_relu_kernel,
        out_shape=jax.ShapeDtypeStruct((rows, wc), jnp.float32),
        grid=(rows // rblk,),
        in_specs=[
            pl.BlockSpec((rblk, wc), lambda i: (i, 0)),
            pl.BlockSpec((1, wc), lambda i: (0, 0)),
            pl.BlockSpec((1, wc), lambda i: (0, 0)),
        ],
        out_specs=pl.BlockSpec((rblk, wc), lambda i: (i, 0)),
        compiler_params=pltpu.CompilerParams(
            dimension_semantics=("parallel",),
            vmem_limit_bytes=_VMEM_LIMIT),
    )(y2d, scale_row, shift_row)


# ------------------------------- full Conv2 module --------------------------

def conv2_forward(x_nchw, params, *, eps=1e-5):
    """params = ((w1, b1, g1, beta1), (w2, b2, g2, beta2)); x: (N, Cin, H, W)."""
    (w1, b1, g1, bt1), (w2, b2, g2, bt2) = params
    N, Cin, H, W = x_nchw.shape
    Cout1, Cout2 = w1.shape[0], w2.shape[0]
    K = w1.shape[2]
    pad = K // 2

    # NCHW -> NHWC once, lane-flatten (W, C) -> W*C, H-halo pad, bf16 storage.
    x = jnp.transpose(x_nchw, (0, 2, 3, 1)).reshape(N, H, W * Cin)
    x = jnp.pad(x.astype(jnp.float32), ((0, 0), (pad, pad), (0, 0)))
    x = x.astype(jnp.bfloat16)

    # ---- layer 1: conv + bias + partial BN stats (raw bf16 output) ---------
    y1, mean1, var1 = _conv_pass(x, w1, b1, H=H, W=W, Cin=Cin,
                                 prev_scale=None, prev_shift=None)
    scale1 = g1.astype(jnp.float32) * lax.rsqrt(var1 + eps)
    shift1 = bt1.astype(jnp.float32) - mean1 * scale1

    # ---- layer 2: fused (BN1 + ReLU) prologue + conv + bias + stats --------
    # TODO(synk): write y1 straight into an H-padded buffer from the layer-1
    # kernel to drop this 1-row-halo host-side pad copy.
    y1p = jnp.pad(y1, ((0, 0), (pad, pad), (0, 0)))
    y2, mean2, var2 = _conv_pass(y1p, w2, b2, H=H, W=W, Cin=Cout1,
                                 prev_scale=scale1, prev_shift=shift1)
    scale2 = g2.astype(jnp.float32) * lax.rsqrt(var2 + eps)
    shift2 = bt2.astype(jnp.float32) - mean2 * scale2

    # ---- final standalone BN2 + ReLU epilogue (lane-dense elementwise) -----
    out2d = _bn_relu_pass(y2.reshape(N * H, W * Cout2), scale2, shift2, W=W)
    return jnp.transpose(out2d.reshape(N, H, W, Cout2), (0, 3, 1, 2))


# ------------------------------- pure-JAX reference -------------------------

def _ref_block(x, w, b, g, bt, eps):
    y = lax.conv_general_dilated(
        x.astype(jnp.float32), w.astype(jnp.float32), (1, 1), 'SAME',
        dimension_numbers=('NCHW', 'OIHW', 'NCHW'))
    y = y + b.reshape(1, -1, 1, 1)
    mean = jnp.mean(y, axis=(0, 2, 3), keepdims=True)
    var = jnp.mean((y - mean) ** 2, axis=(0, 2, 3), keepdims=True)
    y = (y - mean) * lax.rsqrt(var + eps) * g.reshape(1, -1, 1, 1) \
        + bt.reshape(1, -1, 1, 1)
    return jnp.maximum(y, 0.0)


def _reference(x, params, eps=1e-5):
    y = x.astype(jnp.float32)
    for (w, b, g, bt) in params:
        y = _ref_block(y, w, b, g, bt, eps)
    return y


if __name__ == "__main__":
    # Conv2(in_chs=4, out_chs=8) on a small NCHW input.
    N, Cin, H, W = 2, 4, 16, 16
    Cout, K = 8, 3

    key = jax.random.PRNGKey(0)
    kx, k1, k2, k3, k4 = jax.random.split(key, 5)
    x = jax.random.normal(kx, (N, Cin, H, W), dtype=jnp.float32)
    w1 = jax.random.normal(k1, (Cout, Cin, K, K), dtype=jnp.float32) * 0.1
    b1 = jax.random.normal(k2, (Cout,), dtype=jnp.float32) * 0.1
    w2 = jax.random.normal(k3, (Cout, Cout, K, K), dtype=jnp.float32) * 0.1
    b2 = jax.random.normal(k4, (Cout,), dtype=jnp.float32) * 0.1
    g1 = jnp.ones((Cout,), jnp.float32)      # BatchNorm2d default init
    bt1 = jnp.zeros((Cout,), jnp.float32)
    g2 = jnp.ones((Cout,), jnp.float32)
    bt2 = jnp.zeros((Cout,), jnp.float32)
    params = ((w1, b1, g1, bt1), (w2, b2, g2, bt2))

    out = conv2_forward(x, params)
    out = jax.block_until_ready(out)
    assert out.shape == (N, Cout, H, W), out.shape

    ref = _reference(x, params)
    err = float(jnp.max(jnp.abs(out - ref)))
    # bf16 MXU operands + bf16 intermediate storage (f32 accumulation/stats):
    # compare at bf16-level tolerance.
    assert err < 1e-1, err

    print("KERNEL_OK")
</pallas_src>

<mosaic_0001>
module attributes {stable_mosaic.version = 11 : i64} {
  func.func @_conv_stats_kernel(%arg0: i32, %arg1: i32, %arg2: memref<1x18x64xbf16, #tpu.memory_space<vmem>>, %arg3: memref<3x64x128xbf16, #tpu.memory_space<vmem>>, %arg4: memref<1x128xf32, #tpu.memory_space<vmem>>, %arg5: memref<1x64xf32, #tpu.memory_space<vmem>>, %arg6: memref<1x64xf32, #tpu.memory_space<vmem>>, %arg7: memref<1x16x128xbf16, #tpu.memory_space<vmem>>, %arg8: memref<1x1x2x128xf32, #tpu.memory_space<vmem>>) attributes {dimension_semantics = [#tpu.dimension_semantics<parallel>, #tpu.dimension_semantics<parallel>], iteration_bounds = array<i64: 2, 1>, scalar_prefetch = 0 : i64, scratch_operands = 0 : i64, tpu.core_type = #tpu.core_type<tc>, window_params = [{transform_indices = @transform_0, window_bounds = array<i64: 1, 18, 64>}, {pipeline_mode = #tpu.pipeline_mode<synchronous>, transform_indices = @transform_1, window_bounds = array<i64: 3, 64, 128>}, {pipeline_mode = #tpu.pipeline_mode<synchronous>, transform_indices = @transform_2, window_bounds = array<i64: 1, 128>}, {pipeline_mode = #tpu.pipeline_mode<synchronous>, transform_indices = @transform_3, window_bounds = array<i64: 1, 64>}, {pipeline_mode = #tpu.pipeline_mode<synchronous>, transform_indices = @transform_4, window_bounds = array<i64: 1, 64>}, {transform_indices = @transform_5, window_bounds = array<i64: 1, 16, 128>}, {transform_indices = @transform_6, window_bounds = array<i64: 1, 1, 2, 128>}]} {
    %c16_i32 = arith.constant 16 : i32
    %0 = arith.muli %arg1, %c16_i32 : i32
    %1 = tpu.assume_multiple %0, 16 : i32
    %c0 = arith.constant 0 : index
    %2 = arith.index_cast %1 : i32 to index
    %c0_0 = arith.constant 0 : index
    %3 = vector.load %arg2[%c0, %2, %c0_0] : memref<1x18x64xbf16, #tpu.memory_space<vmem>>, vector<1x18x64xbf16>
    %4 = vector.shape_cast %3 : vector<1x18x64xbf16> to vector<18x64xbf16>
    %5 = vector.extract_strided_slice %4 {offsets = [0, 0], sizes = [16, 64], strides = [1, 1]} : vector<18x64xbf16> to vector<16x64xbf16>
    %c0_1 = arith.constant 0 : index
    %c0_2 = arith.constant 0 : index
    %c0_3 = arith.constant 0 : index
    %6 = vector.load %arg3[%c0_1, %c0_2, %c0_3] : memref<3x64x128xbf16, #tpu.memory_space<vmem>>, vector<1x64x128xbf16>
    %7 = vector.shape_cast %6 : vector<1x64x128xbf16> to vector<64x128xbf16>
    %cst = arith.constant dense<0.000000e+00> : vector<16x128xf32>
    %8 = tpu.matmul %5, %7, %cst {dimension_numbers = #tpu.dot_dimension_numbers<[1], [0], [0], [1], [0, 0, 1, 1], [], []>} : vector<16x64xbf16>, vector<64x128xbf16>, vector<16x128xf32> -> vector<16x128xf32>
    %9 = vector.extract_strided_slice %4 {offsets = [1, 0], sizes = [16, 64], strides = [1, 1]} : vector<18x64xbf16> to vector<16x64xbf16>
    %c1 = arith.constant 1 : index
    %c0_4 = arith.constant 0 : index
    %c0_5 = arith.constant 0 : index
    %10 = vector.load %arg3[%c1, %c0_4, %c0_5] : memref<3x64x128xbf16, #tpu.memory_space<vmem>>, vector<1x64x128xbf16>
    %11 = vector.shape_cast %10 : vector<1x64x128xbf16> to vector<64x128xbf16>
    %cst_6 = arith.constant dense<0.000000e+00> : vector<16x128xf32>
    %12 = tpu.matmul %9, %11, %cst_6 {dimension_numbers = #tpu.dot_dimension_numbers<[1], [0], [0], [1], [0, 0, 1, 1], [], []>} : vector<16x64xbf16>, vector<64x128xbf16>, vector<16x128xf32> -> vector<16x128xf32>
    %13 = arith.addf %8, %12 : vector<16x128xf32>
    %14 = vector.extract_strided_slice %4 {offsets = [2, 0], sizes = [16, 64], strides = [1, 1]} : vector<18x64xbf16> to vector<16x64xbf16>
    %c2 = arith.constant 2 : index
    %c0_7 = arith.constant 0 : index
    %c0_8 = arith.constant 0 : index
    %15 = vector.load %arg3[%c2, %c0_7, %c0_8] : memref<3x64x128xbf16, #tpu.memory_space<vmem>>, vector<1x64x128xbf16>
    %16 = vector.shape_cast %15 : vector<1x64x128xbf16> to vector<64x128xbf16>
    %cst_9 = arith.constant dense<0.000000e+00> : vector<16x128xf32>
    %17 = tpu.matmul %14, %16, %cst_9 {dimension_numbers = #tpu.dot_dimension_numbers<[1], [0], [0], [1], [0, 0, 1, 1], [], []>} : vector<16x64xbf16>, vector<64x128xbf16>, vector<16x128xf32> -> vector<16x128xf32>
    %18 = arith.addf %13, %17 : vector<16x128xf32>
    %c0_10 = arith.constant 0 : index
    %c0_11 = arith.constant 0 : index
    %19 = vector.load %arg4[%c0_10, %c0_11] : memref<1x128xf32, #tpu.memory_space<vmem>>, vector<1x128xf32>
    %20 = vector.broadcast %19 : vector<1x128xf32> to vector<16x128xf32>
    %21 = arith.addf %18, %20 : vector<16x128xf32>
    %22 = arith.truncf %21 : vector<16x128xf32> to vector<16x128xbf16>
    %c0_12 = arith.constant 0 : index
    %c0_13 = arith.constant 0 : index
    %c0_14 = arith.constant 0 : index
    %23 = vector.load %arg7[%c0_12, %c0_13, %c0_14] : memref<1x16x128xbf16, #tpu.memory_space<vmem>>, vector<1x16x128xbf16>
    %24 = vector.shape_cast %23 : vector<1x16x128xbf16> to vector<16x128xbf16>
    %25 = vector.shape_cast %22 : vector<16x128xbf16> to vector<1x16x128xbf16>
    tpu.vector_store %arg7[%c0_12, %c0_13, %c0_14], %25 {strides = array<i32>} : memref<1x16x128xbf16, #tpu.memory_space<vmem>>, vector<1x16x128xbf16>,
    %cst_15 = arith.constant dense<0.000000e+00> : vector<128xf32>
    %26 = vector.multi_reduction <add>, %21, %cst_15 [0] : vector<16x128xf32> to vector<128xf32>
    %27 = vector.shape_cast %26 : vector<128xf32> to vector<1x128xf32>
    %28 = arith.mulf %21, %21 : vector<16x128xf32>
    %cst_16 = arith.constant dense<0.000000e+00> : vector<128xf32>
    %29 = vector.multi_reduction <add>, %28, %cst_16 [0] : vector<16x128xf32> to vector<128xf32>
    %30 = vector.shape_cast %29 : vector<128xf32> to vector<1x128xf32>
    %31 = tpu.concatenate %27, %30 in 0 : vector<1x128xf32>, vector<1x128xf32> -> vector<2x128xf32>
    %c0_17 = arith.constant 0 : index
    %c0_18 = arith.constant 0 : index
    %c0_19 = arith.constant 0 : index
    %c0_20 = arith.constant 0 : index
    %32 = vector.load %arg8[%c0_17, %c0_18, %c0_19, %c0_20] : memref<1x1x2x128xf32, #tpu.memory_space<vmem>>, vector<1x1x2x128xf32>
    %33 = vector.shape_cast %32 : vector<1x1x2x128xf32> to vector<2x128xf32>
    %34 = vector.shape_cast %31 : vector<2x128xf32> to vector<1x1x2x128xf32>
    tpu.vector_store %arg8[%c0_17, %c0_18, %c0_19, %c0_20], %34 {strides = array<i32>} : memref<1x1x2x128xf32, #tpu.memory_space<vmem>>, vector<1x1x2x128xf32>,
    return
  }
  func.func @transform_0(%arg0: i32, %arg1: i32) -> (i32, i32, i32) {
    %c0_i32 = arith.constant 0 : i32
    %c0_i32_0 = arith.constant 0 : i32
    %c0_i32_1 = arith.constant 0 : i32
    return %arg0, %c0_i32, %c0_i32_0 : i32, i32, i32
  }
  func.func @transform_1(%arg0: i32, %arg1: i32) -> (i32, i32, i32) {
    %c0_i32 = arith.constant 0 : i32
    %c0_i32_0 = arith.constant 0 : i32
    %c0_i32_1 = arith.constant 0 : i32
    %c0_i32_2 = arith.constant 0 : i32
    return %c0_i32, %c0_i32_0, %c0_i32_1 : i32, i32, i32
  }
  func.func @transform_2(%arg0: i32, %arg1: i32) -> (i32, i32) {
    %c0_i32 = arith.constant 0 : i32
    %c0_i32_0 = arith.constant 0 : i32
    %c0_i32_1 = arith.constant 0 : i32
    return %c0_i32, %c0_i32_0 : i32, i32
  }
  func.func @transform_3(%arg0: i32, %arg1: i32) -> (i32, i32) {
    %c0_i32 = arith.constant 0 : i32
    %c0_i32_0 = arith.constant 0 : i32
    %c0_i32_1 = arith.constant 0 : i32
    return %c0_i32, %c0_i32_0 : i32, i32
  }
  func.func @transform_4(%arg0: i32, %arg1: i32) -> (i32, i32) {
    %c0_i32 = arith.constant 0 : i32
    %c0_i32_0 = arith.constant 0 : i32
    %c0_i32_1 = arith.constant 0 : i32
    return %c0_i32, %c0_i32_0 : i32, i32
  }
  func.func @transform_5(%arg0: i32, %arg1: i32) -> (i32, i32, i32) {
    %c0_i32 = arith.constant 0 : i32
    %c0_i32_0 = arith.constant 0 : i32
    return %arg0, %arg1, %c0_i32 : i32, i32, i32
  }
  func.func @transform_6(%arg0: i32, %arg1: i32) -> (i32, i32, i32, i32) {
    %c0_i32 = arith.constant 0 : i32
    %c0_i32_0 = arith.constant 0 : i32
    %c0_i32_1 = arith.constant 0 : i32
    return %arg0, %arg1, %c0_i32, %c0_i32_0 : i32, i32, i32, i32
  }
}

</mosaic_0001>

<llo_original>
// kernel: tpu_custom_call.1
$region0: #{tpu_custom_call.1}
  #allocation0 [shape = 'u32[]', space=smem, size = 0x4, offset = 0x4, fixed_abs, tag = 'smem constant byte address 0x4 - core index']
  #allocation1 [shape = 'u32[144,128]{1,0:T(1,128)}', space=vmem, size = 0x12000, scoped, tag = 'internal scratch']
  %s0 = inlined_call_operand.vmem [shape: bf16[2,18,64], index: 0, kind: input, shape index: {}]
  %s1 = inlined_call_operand.hbm [shape: bf16[3,64,128], index: 1, kind: input, shape index: {}]
  %s2 = inlined_call_operand.vmem [shape: f32[1,128], index: 2, kind: input, shape index: {}]
  %s3 = inlined_call_operand.vmem [shape: f32[1,64], index: 3, kind: input, shape index: {}]
  %s4 = inlined_call_operand.vmem [shape: f32[1,64], index: 4, kind: input, shape index: {}]
  %s5 = inlined_call_operand.hbm [shape: bf16[2,16,128], index: 5, kind: output, shape index: {0}]
  %s6 = inlined_call_operand.hbm [shape: f32[2,1,2,128], index: 6, kind: output, shape index: {1}]
  %7 = xla_tuple %s5, %s6
  %s8 = sld [smem:[#allocation0]]
  $region65: #{tpu_custom_call.1} parent=0
    _
  %s10 = ssub.s32 1, %s8
  %s11 = scalar_select 0, %s10, %s8
  $region1: #{tpu_custom_call.1} parent=0
    #allocation2 [shape = 'u8[49152]{0}', space=vmem, size = 0xc000, scoped, tag = 'input window, operand 1, single buffered']
    #allocation3 [shape = 's32[2]{0}', space=sflag, size = 0x8, scoped, tag = 'scoped memory for tpu_custom_call.1']
    #allocation4 [shape = 's32[2]{0}', space=sflag, size = 0x8, scoped, tag = 'scoped memory for tpu_custom_call.1']
    #allocation5 [shape = 'u8[8192]{0}', space=vmem, size = 0x2000, scoped, tag = 'output window, operand 0']
    #allocation6 [shape = 'u8[2048]{0}', space=vmem, size = 0x800, scoped, tag = 'output window, operand 1']
    #allocation7 [shape = 's32[2]{0}', space=sflag, size = 0x8, scoped, tag = 'scoped memory for tpu_custom_call.1']
    %12 = vsyncpa [#allocation3], 0
    %13 = vsyncpa [#allocation4], 0
    %s14 = scalar_lea.sflag [#allocation4], 1
    %15 = vsyncpa %s14, 0
    %16 = vsyncpa [#allocation7], 0
    %s17 = scalar_lea.sflag [#allocation7], 1
    %18 = vsyncpa %s17, 0
    loop: start=0, step=1, limit=4
    $region2: #{tpu_custom_call.1} parent=1 // loop_pre_header
      _
    $region3: #{tpu_custom_call.1} parent=1 // loop_header
      %s20 = sphi 0, %s24
      %p21 = scmp.ge.s32.totalorder %s20, 4
      %s27 = sphi 0, %s39
      %s28 = sphi 0, %s35
      %s29 = sphi 0, %s27
      %s30 = sphi 0, %s28
      %s31 = sphi 0, %s29
      %s32 = sphi 0, %s30
      %s42 = sphi 0, %s44
      %s45 = sphi 0, %s42
      %s46 = sphi 0, %s45
      %s62 = sphi 0, %s46
      %s66 = sphi 0, %s66
      %s68 = sphi 0, %s66
      %s69 = sphi 0, %s68
      %s83 = sphi 0, %s69
      %s87 = sphi 0, %s87
      %s89 = sphi 0, %s87
      %s90 = sphi 0, %s89
      %s104 = sphi 0, %s90
      %s108 = sphi 0, %s108
      %s110 = sphi 0, %s108
      %s111 = sphi 0, %s110
      %s125 = sphi 0, %s111
      %s129 = sphi 0, %s129
      %s131 = sphi 0, %s129
      %s132 = sphi 0, %s131
      %s146 = sphi 0, %s132
      %s154 = sphi 0, %s156
      %s157 = sphi 0, %s154
      %s158 = sphi 0, %s157
      %s174 = sphi 0, %s158
      %s182 = sphi 0, %s184
      %s185 = sphi 0, %s182
      %s186 = sphi 0, %s185
      %s202 = sphi 0, %s186
    $region4: #{tpu_custom_call.1} parent=1 // loop_header_branch
      %23 = sbr.rel (%p21) target = $region8
    $region5: #{tpu_custom_call.1} parent=1 // loop_body
      %s25 = ssub.s32 %s20, 1
      %s26 = ssub.s32 %s20, 2
      %s33 = sadd.s32 1, %s28
      %p34 = scmp.ge.s32.totalorder %s33, 1
      %s35 = scalar_select %p34, 0, %s33
      %s36 = sadd.s32 1, %s27
      %s37 = scalar_select %p34, %s36, %s27
      %p38 = scmp.ge.s32.totalorder %s37, 2
      %s39 = scalar_select %p38, 0, %s37
      %s40 = ssub.s32 %s27, %s39
      %p41 = scmp.eq.s32.totalorder %s40, 0
      %s43 = sadd.s32 %s42, 1
      %s44 = scalar_select %p41, %s42, %s43
      %p47 = pneg %p41
      %p48 = scmp.eq.s32.totalorder %s20, 1
      %p49 = por %p47, %p48
      %p50 = scmp.ne.s32.totalorder %s42, %s45
      %p51 = scmp.eq.s32.totalorder %s20, 0
      %p52 = por %p50, %p51
      %p53 = scmp.ne.s32.totalorder %s42, %s45
      %p54 = scmp.eq.s32.totalorder %s25, 1
      %p55 = por %p53, %p54
      %p56 = scmp.ne.s32.totalorder %s45, %s46
      %p57 = scmp.eq.s32.totalorder %s25, 0
      %p58 = por %p56, %p57
      %p59 = scmp.ne.s32.totalorder %s45, %s46
      %p60 = scmp.eq.s32.totalorder %s26, 1
      %p61 = por %p59, %p60
      %p63 = scmp.ne.s32.totalorder %s46, %s62
      %p64 = scmp.eq.s32.totalorder %s26, 0
      %p65 = por %p63, %p64
      %s67 = sadd.s32 %s66, 1
      %p70 = scmp.eq.s32.totalorder %s20, 1
      %p71 = scmp.ne.s32.totalorder %s66, %s68
      %p72 = scmp.eq.s32.totalorder %s20, 0
      %p73 = por %p71, %p72
      %p74 = scmp.ne.s32.totalorder %s66, %s68
      %p75 = scmp.eq.s32.totalorder %s25, 1
      %p76 = por %p74, %p75
      %p77 = scmp.ne.s32.totalorder %s68, %s69
      %p78 = scmp.eq.s32.totalorder %s25, 0
      %p79 = por %p77, %p78
      %p80 = scmp.ne.s32.totalorder %s68, %s69
      %p81 = scmp.eq.s32.totalorder %s26, 1
      %p82 = por %p80, %p81
      %p84 = scmp.ne.s32.totalorder %s69, %s83
      %p85 = scmp.eq.s32.totalorder %s26, 0
      %p86 = por %p84, %p85
      %s88 = sadd.s32 %s87, 1
      %p91 = scmp.eq.s32.totalorder %s20, 1
      %p92 = scmp.ne.s32.totalorder %s87, %s89
      %p93 = scmp.eq.s32.totalorder %s20, 0
      %p94 = por %p92, %p93
      %p95 = scmp.ne.s32.totalorder %s87, %s89
      %p96 = scmp.eq.s32.totalorder %s25, 1
      %p97 = por %p95, %p96
      %p98 = scmp.ne.s32.totalorder %s89, %s90
      %p99 = scmp.eq.s32.totalorder %s25, 0
      %p100 = por %p98, %p99
      %p101 = scmp.ne.s32.totalorder %s89, %s90
      %p102 = scmp.eq.s32.totalorder %s26, 1
      %p103 = por %p101, %p102
      %p105 = scmp.ne.s32.totalorder %s90, %s104
      %p106 = scmp.eq.s32.totalorder %s26, 0
      %p107 = por %p105, %p106
      %s109 = sadd.s32 %s108, 1
      %p112 = scmp.eq.s32.totalorder %s20, 1
      %p113 = scmp.ne.s32.totalorder %s108, %s110
      %p114 = scmp.eq.s32.totalorder %s20, 0
      %p115 = por %p113, %p114
      %p116 = scmp.ne.s32.totalorder %s108, %s110
      %p117 = scmp.eq.s32.totalorder %s25, 1
      %p118 = por %p116, %p117
      %p119 = scmp.ne.s32.totalorder %s110, %s111
      %p120 = scmp.eq.s32.totalorder %s25, 0
      %p121 = por %p119, %p120
      %p122 = scmp.ne.s32.totalorder %s110, %s111
      %p123 = scmp.eq.s32.totalorder %s26, 1
      %p124 = por %p122, %p123
      %p126 = scmp.ne.s32.totalorder %s111, %s125
      %p127 = scmp.eq.s32.totalorder %s26, 0
      %p128 = por %p126, %p127
      %s130 = sadd.s32 %s129, 1
      %p133 = scmp.eq.s32.totalorder %s20, 1
      %p134 = scmp.ne.s32.totalorder %s129, %s131
      %p135 = scmp.eq.s32.totalorder %s20, 0
      %p136 = por %p134, %p135
      %p137 = scmp.ne.s32.totalorder %s129, %s131
      %p138 = scmp.eq.s32.totalorder %s25, 1
      %p139 = por %p137, %p138
      %p140 = scmp.ne.s32.totalorder %s131, %s132
      %p141 = scmp.eq.s32.totalorder %s25, 0
      %p142 = por %p140, %p141
      %p143 = scmp.ne.s32.totalorder %s131, %s132
      %p144 = scmp.eq.s32.totalorder %s26, 1
      %p145 = por %p143, %p144
      %p147 = scmp.ne.s32.totalorder %s132, %s146
      %p148 = scmp.eq.s32.totalorder %s26, 0
      %p149 = por %p147, %p148
      %s150 = ssub.s32 %s27, %s39
      %s151 = ssub.s32 %s28, %s35
      %s152 = sor.u32 %s150, %s151
      %p153 = scmp.eq.s32.totalorder %s152, 0
      %s155 = sadd.s32 %s154, 1
      %s156 = scalar_select %p153, %s154, %s155
      %p159 = pneg %p153
      %p160 = scmp.eq.s32.totalorder %s20, 1
      %p161 = por %p159, %p160
      %p162 = scmp.ne.s32.totalorder %s154, %s157
      %p163 = scmp.eq.s32.totalorder %s20, 0
      %p164 = por %p162, %p163
      %p165 = scmp.ne.s32.totalorder %s154, %s157
      %p166 = scmp.eq.s32.totalorder %s25, 1
      %p167 = por %p165, %p166
      %p168 = scmp.ne.s32.totalorder %s157, %s158
      %p169 = scmp.eq.s32.totalorder %s25, 0
      %p170 = por %p168, %p169
      %p171 = scmp.ne.s32.totalorder %s157, %s158
      %p172 = scmp.eq.s32.totalorder %s26, 1
      %p173 = por %p171, %p172
      %p175 = scmp.ne.s32.totalorder %s158, %s174
      %p176 = scmp.eq.s32.totalorder %s26, 0
      %p177 = por %p175, %p176
      %s178 = ssub.s32 %s27, %s39
      %s179 = ssub.s32 %s28, %s35
      %s180 = sor.u32 %s178, %s179
      %p181 = scmp.eq.s32.totalorder %s180, 0
      %s183 = sadd.s32 %s182, 1
      %s184 = scalar_select %p181, %s182, %s183
      %p187 = pneg %p181
      %p188 = scmp.eq.s32.totalorder %s20, 1
      %p189 = por %p187, %p188
      %p190 = scmp.ne.s32.totalorder %s182, %s185
      %p191 = scmp.eq.s32.totalorder %s20, 0
      %p192 = por %p190, %p191
      %p193 = scmp.ne.s32.totalorder %s182, %s185
      %p194 = scmp.eq.s32.totalorder %s25, 1
      %p195 = por %p193, %p194
      %p196 = scmp.ne.s32.totalorder %s185, %s186
      %p197 = scmp.eq.s32.totalorder %s25, 0
      %p198 = por %p196, %p197
      %p199 = scmp.ne.s32.totalorder %s185, %s186
      %p200 = scmp.eq.s32.totalorder %s26, 1
      %p201 = por %p199, %p200
      %p203 = scmp.ne.s32.totalorder %s186, %s202
      %p204 = scmp.eq.s32.totalorder %s26, 0
      %p205 = por %p203, %p204
      %p206 = scmp.le.s32.totalorder 1, %s20
      %p207 = scmp.lt.s32.totalorder %s20, 3
      %p208 = pnand %p206, %p207
      %p209 = pneg %p208
      // Predicated region
      $region9: #{tpu_custom_call.1} parent=5 // pred_check
        _
      $region10: #{tpu_custom_call.1} parent=5 // pred_check_branch
        %211 = sbr.rel (%p208) target = $region12
      $region11: #{tpu_custom_call.1} parent=5 // pred_region
        %s212 = ssub.s32 %s20, 1
        // Predicated region
        $region13: #{tpu_custom_call.1} parent=11 // pred_check
          %p213 = pneg %p79
        $region14: #{tpu_custom_call.1} parent=11 // pred_check_branch
          %215 = sbr.rel (%p213) target = $region16
        $region15: #{tpu_custom_call.1} parent=11 // pred_region
          %s217 = ssub.s32 1536, 1536
          %218 = vsyncadd [#allocation3], %s217
          %s219 = sshll.u32 [#allocation2], 4
          %s220 = int_to_ptr.vmem [resolvable:$true] %s219
          %225 = dma.hbm_to_vmem [thread:$0]  %s1, 1536, %s220, [#allocation3], 64, 64, 4
        $region16: #{tpu_custom_call.1} parent=11 // pred_fallthru
          _
        // Predicated region
        $region17: #{tpu_custom_call.1} parent=11 // pred_check
          %p226 = pneg %p100
        $region18: #{tpu_custom_call.1} parent=11 // pred_check_branch
          %228 = sbr.rel (%p226) target = $region20
        $region19: #{tpu_custom_call.1} parent=11 // pred_region
          _
        $region20: #{tpu_custom_call.1} parent=11 // pred_fallthru
          _
        // Predicated region
        $region21: #{tpu_custom_call.1} parent=11 // pred_check
          %p229 = pneg %p121
        $region22: #{tpu_custom_call.1} parent=11 // pred_check_branch
          %231 = sbr.rel (%p229) target = $region24
        $region23: #{tpu_custom_call.1} parent=11 // pred_region
          _
        $region24: #{tpu_custom_call.1} parent=11 // pred_fallthru
          _
        // Predicated region
        $region25: #{tpu_custom_call.1} parent=11 // pred_check
          %p232 = pneg %p142
        $region26: #{tpu_custom_call.1} parent=11 // pred_check_branch
          %234 = sbr.rel (%p232) target = $region28
        $region27: #{tpu_custom_call.1} parent=11 // pred_region
          _
        $region28: #{tpu_custom_call.1} parent=11 // pred_fallthru
          _
      $region12: #{tpu_custom_call.1} parent=5 // pred_fallthru
        _
      %p235 = scmp.lt.s32.totalorder %s20, 2
      // Predicated region
      $region29: #{tpu_custom_call.1} parent=5 // pred_check
        %p236 = pneg %p235
      $region30: #{tpu_custom_call.1} parent=5 // pred_check_branch
        %238 = sbr.rel (%p236) target = $region32
      $region31: #{tpu_custom_call.1} parent=5 // pred_region
        // Predicated region
        $region33: #{tpu_custom_call.1} parent=31 // pred_check
          %p239 = pneg %p52
        $region34: #{tpu_custom_call.1} parent=31 // pred_check_branch
          %241 = sbr.rel (%p239) target = $region36
        $region35: #{tpu_custom_call.1} parent=31 // pred_region
          %p242 = scmp.lt.s32.totalorder %s27, 1
          %s243 = scalar_select %p242, %s27, 1
          %s244 = smul.addr %s243, 3
          %s245 = smul.addr %s244, 4
          %s246 = scalar_lea.vmem %s0, %s245
        $region36: #{tpu_custom_call.1} parent=31 // pred_fallthru
          _
      $region32: #{tpu_custom_call.1} parent=5 // pred_fallthru
        _
      %p247 = scmp.le.s32.totalorder 1, %s20
      %p248 = scmp.lt.s32.totalorder %s20, 3
      %p249 = pnand %p247, %p248
      %p250 = pneg %p249
      // Predicated region
      $region37: #{tpu_custom_call.1} parent=5 // pred_check
        _
      $region38: #{tpu_custom_call.1} parent=5 // pred_check_branch
        %252 = sbr.rel (%p249) target = $region40
      $region39: #{tpu_custom_call.1} parent=5 // pred_region
        %s253 = ssub.s32 %s20, 1
        // Predicated region
        $region41: #{tpu_custom_call.1} parent=39 // pred_check
          %p254 = pneg %p79
        $region42: #{tpu_custom_call.1} parent=39 // pred_check_branch
          %256 = sbr.rel (%p254) target = $region44
        $region43: #{tpu_custom_call.1} parent=39 // pred_region
          %257 = dma.done [#allocation3], 1536
        $region44: #{tpu_custom_call.1} parent=39 // pred_fallthru
          _
        %p258 = scmp.lt.s32.totalorder %s29, 1
        %s259 = scalar_select %p258, %s29, 1
        %s260 = smul.addr %s259, 3
        %s261 = smul.addr %s260, 4
        %s262 = scalar_lea.vmem %s0, %s261
        %p263 = pneg %p58
        %p264 = pneg %p55
        %p265 = pneg %p79
        %p266 = pneg %p76
        %p267 = pneg %p100
        %p268 = pneg %p97
        %p269 = pneg %p121
        %p270 = pneg %p118
        %p271 = pneg %p142
        %p272 = pneg %p139
        %p273 = pneg %p170
        %p274 = pneg %p167
        %s275 = sand.u32 %s157, 1
        %s276 = scalar_lea.sflag [#allocation4], %s275
        %s277 = sand.u32 %s157, 1
        %s278 = smul.addr %s277, 8
        %s279 = scalar_lea.vmem [#allocation5], %s278
        %p280 = pneg %p198
        %p281 = pneg %p195
        %s282 = sand.u32 %s185, 1
        %s283 = scalar_lea.sflag [#allocation7], %s282
        %s284 = sand.u32 %s185, 1
        %s285 = smul.addr %s284, 2
        %s286 = scalar_lea.vmem [#allocation6], %s285
        %p287 = scmp.lt.s32.totalorder %s29, 1
        %s288 = scalar_select %p287, %s29, 1
        %s289 = smul.addr %s288, 3
        %s290 = smul.addr %s289, 4
        %s291 = scalar_lea.vmem %s0, %s290
        %s292 = smul.u32 2, %s30
        %s294 = smul.u32 %s30, 16
        %s295 = sshra.s32 %s294, 3
        %s296 = sand.u32 %s294, 7
        %s297 = smul.addr %s295, 4
        %s298 = scalar_lea.vmem %s291, %s297
        %v299 = vld [vmem:[%s298] sm:$0xf]
        %v300 = vld [vmem:[%s298 + $0x4] sm:$0xf]
        %v301 = vld [vmem:[%s298 + $0x8] sm:$0x1]
        %v302 = vld [vmem:[#allocation2] sm:$0xf]
        %v303 = vld [vmem:[#allocation2 + $0x4] sm:$0xf]
        %v304 = vld [vmem:[#allocation2 + $0x8] sm:$0xf]
        %v305 = vld [vmem:[#allocation2 + $0xc] sm:$0xf]
        %v306 = vld [vmem:[#allocation2 + $0x10] sm:$0xf]
        %v307 = vld [vmem:[#allocation2 + $0x14] sm:$0xf]
        %v308 = vld [vmem:[#allocation2 + $0x18] sm:$0xf]
        %v309 = vld [vmem:[#allocation2 + $0x1c] sm:$0xf]
        %s310 = scalar_lea.vmem [#allocation2], 32
        %v311 = vld [vmem:[%s310] sm:$0xf]
        %v312 = vld [vmem:[%s310 + $0x4] sm:$0xf]
        %v313 = vld [vmem:[%s310 + $0x8] sm:$0xf]
        %v314 = vld [vmem:[%s310 + $0xc] sm:$0xf]
        %v315 = vld [vmem:[%s310 + $0x10] sm:$0xf]
        %v316 = vld [vmem:[%s310 + $0x14] sm:$0xf]
        %v317 = vld [vmem:[%s310 + $0x18] sm:$0xf]
        %v318 = vld [vmem:[%s310 + $0x1c] sm:$0xf]
        %v322 = vunpack.c.l.b16 %v299
        %v323 = vunpack.c.l.b16 %v300
        %v324 = vunpack.c.l.b16 %v301
        %v325 = vpack.c.b16 %v323, %v322
        %v326 = vpack.c.b16 %v324, %v324
        %vm327 = vsmask.f32 7424
        %v329 = vshrl.u32 %v325, 16
        %v331 = vshll.u32 %v325, 16
        %v333 = vrot.slane %v331, 1
        %v334 = vor.u32 %v329, %v333
        %v336 = vshll.u32 %v326, 16
        %v338 = vrot.slane %v336, 1
        %v339 = vsel %vm327, %v334, %v338
        %v348 = vunpack.c.l.b16 %v311
        %v349 = vunpack.c.l.b16 %v312
        %v350 = vunpack.c.l.b16 %v313
        %v351 = vunpack.c.l.b16 %v314
        %v352 = vunpack.c.l.b16 %v315
        %v353 = vunpack.c.l.b16 %v316
        %v354 = vunpack.c.l.b16 %v317
        %v355 = vunpack.c.l.b16 %v318
        %v356 = vpack.c.b16 %v349, %v348
        %v357 = vpack.c.b16 %v351, %v350
        %v358 = vpack.c.b16 %v353, %v352
        %v359 = vpack.c.b16 %v355, %v354
        %vm364 = vcmask 523264
        %v366 = vsel %vm364, %v339, 0
        %368 = vmatprep.subr.bf16.mxu0 0
        %369 = vmatpush1.bf16.msra.mxu0 0
        %370 = vmatprep.subr.bf16.mxu0 0
        %371 = vmatpush1.bf16.msra.mxu0 0
        %372 = vmatprep.subr.bf16.mxu0 0
        %373 = vmatpush1.bf16.msra.mxu0 0
        %374 = vmatprep.subr.bf16.mxu0 0
        %375 = vmatpush1.bf16.msra.mxu0 0
        %376 = vmatprep.subr.bf16.mxu0 0
        %377 = vmatpush1.bf16.msra.mxu0 %v359
        %378 = vmatprep.subr.bf16.mxu0 0
        %379 = vmatpush1.bf16.msra.mxu0 %v358
        %380 = vmatprep.subr.bf16.mxu0 0
        %381 = vmatpush1.bf16.msra.mxu0 %v357
        %382 = vmatprep.subr.bf16.mxu0 0
        %383 = vmatpush1.bf16.msra.mxu0 %v356
        %384 = vmatprep.subr.bf16.mxu0 0
        %385 = vmatpush2.bf16.msra.mxu0 0
        %386 = vmatprep.subr.bf16.mxu0 0
        %387 = vmatpush2.bf16.msra.mxu0 0
        %388 = vmatprep.subr.bf16.mxu0 0
        %389 = vmatpush2.bf16.msra.mxu0 0
        %390 = vmatprep.subr.bf16.mxu0 0
        %391 = vmatpush2.bf16.msra.mxu0 0
        %392 = vmatprep.subr.bf16.mxu0 0
        %393 = vmatpush2.bf16.msra.mxu0 0
        %394 = vmatprep.subr.bf16.mxu0 0
        %395 = vmatpush2.bf16.msra.mxu0 0
        %396 = vmatprep.subr.bf16.mxu0 0
        %397 = vmatpush2.bf16.msra.mxu0 0
        %398 = vmatprep.subr.bf16.mxu0 0
        %399 = vmatpush2.bf16.msra.mxu0 0
        %400 = vmatprep.mubr.bf16.mxu0 0
        %401 = vmatmul.mubr.bf16.gmra.mxu0 %v366
        %v402 = vpop.f32.mrf.mxu0
        %v403 = vadd.f32 0.0, %v402
        %v404 = vpop.f32.mrf.mxu0
        %v405 = vpop.f32.mrf.mxu0
        %v406 = vadd.f32 0.0, %v405
        %v407 = vpop.f32.mrf.mxu0
        %408 = vdwg.mxu0
        %v417 = vunpack.c.l.b16 %v302
        %v418 = vunpack.c.l.b16 %v303
        %v419 = vunpack.c.l.b16 %v304
        %v420 = vunpack.c.l.b16 %v305
        %v421 = vunpack.c.l.b16 %v306
        %v422 = vunpack.c.l.b16 %v307
        %v423 = vunpack.c.l.b16 %v308
        %v424 = vunpack.c.l.b16 %v309
        %v425 = vpack.c.b16 %v418, %v417
        %v426 = vpack.c.b16 %v420, %v419
        %v427 = vpack.c.b16 %v422, %v421
        %v428 = vpack.c.b16 %v424, %v423
        %v433 = vsel %vm364, %v325, 0
        %435 = vmatprep.subr.bf16.mxu0 0
        %436 = vmatpush1.bf16.msra.mxu0 0
        %437 = vmatprep.subr.bf16.mxu0 0
        %438 = vmatpush1.bf16.msra.mxu0 0
        %439 = vmatprep.subr.bf16.mxu0 0
        %440 = vmatpush1.bf16.msra.mxu0 0
        %441 = vmatprep.subr.bf16.mxu0 0
        %442 = vmatpush1.bf16.msra.mxu0 0
        %443 = vmatprep.subr.bf16.mxu0 0
        %444 = vmatpush1.bf16.msra.mxu0 %v428
        %445 = vmatprep.subr.bf16.mxu0 0
        %446 = vmatpush1.bf16.msra.mxu0 %v427
        %447 = vmatprep.subr.bf16.mxu0 0
        %448 = vmatpush1.bf16.msra.mxu0 %v426
        %449 = vmatprep.subr.bf16.mxu0 0
        %450 = vmatpush1.bf16.msra.mxu0 %v425
        %451 = vmatprep.subr.bf16.mxu0 0
        %452 = vmatpush2.bf16.msra.mxu0 0
        %453 = vmatprep.subr.bf16.mxu0 0
        %454 = vmatpush2.bf16.msra.mxu0 0
        %455 = vmatprep.subr.bf16.mxu0 0
        %456 = vmatpush2.bf16.msra.mxu0 0
        %457 = vmatprep.subr.bf16.mxu0 0
        %458 = vmatpush2.bf16.msra.mxu0 0
        %459 = vmatprep.subr.bf16.mxu0 0
        %460 = vmatpush2.bf16.msra.mxu0 0
        %461 = vmatprep.subr.bf16.mxu0 0
        %462 = vmatpush2.bf16.msra.mxu0 0
        %463 = vmatprep.subr.bf16.mxu0 0
        %464 = vmatpush2.bf16.msra.mxu0 0
        %465 = vmatprep.subr.bf16.mxu0 0
        %466 = vmatpush2.bf16.msra.mxu0 0
        %467 = vmatprep.mubr.bf16.mxu0 0
        %468 = vmatmul.mubr.bf16.gmra.mxu0 %v433
        %v469 = vpop.f32.mrf.mxu0
        %v470 = vadd.f32 %v403, %v469
        %v471 = vpop.f32.mrf.mxu0
        %v472 = vpop.f32.mrf.mxu0
        %v473 = vadd.f32 %v406, %v472
        %v474 = vpop.f32.mrf.mxu0
        %475 = vdwg.mxu0
        %s476 = scalar_lea.vmem [#allocation2], 64
        %v477 = vld [vmem:[%s476] sm:$0xf]
        %v478 = vld [vmem:[%s476 + $0x4] sm:$0xf]
        %v479 = vld [vmem:[%s476 + $0x8] sm:$0xf]
        %v480 = vld [vmem:[%s476 + $0xc] sm:$0xf]
        %v481 = vld [vmem:[%s476 + $0x10] sm:$0xf]
        %v482 = vld [vmem:[%s476 + $0x14] sm:$0xf]
        %v483 = vld [vmem:[%s476 + $0x18] sm:$0xf]
        %v484 = vld [vmem:[%s476 + $0x1c] sm:$0xf]
        %vm485 = vcmask 1046528
        %v486 = vrot.slane %v325, 1
        %v487 = vrot.slane %v326, 1
        %v488 = vsel %vm485, %v486, %v487
        %v497 = vunpack.c.l.b16 %v477
        %v498 = vunpack.c.l.b16 %v478
        %v499 = vunpack.c.l.b16 %v479
        %v500 = vunpack.c.l.b16 %v480
        %v501 = vunpack.c.l.b16 %v481
        %v502 = vunpack.c.l.b16 %v482
        %v503 = vunpack.c.l.b16 %v483
        %v504 = vunpack.c.l.b16 %v484
        %v505 = vpack.c.b16 %v498, %v497
        %v506 = vpack.c.b16 %v500, %v499
        %v507 = vpack.c.b16 %v502, %v501
        %v508 = vpack.c.b16 %v504, %v503
        %v514 = vsel %vm364, %v488, 0
        %516 = vmatprep.subr.bf16.mxu0 0
        %517 = vmatpush1.bf16.msra.mxu0 0
        %518 = vmatprep.subr.bf16.mxu0 0
        %519 = vmatpush1.bf16.msra.mxu0 0
        %520 = vmatprep.subr.bf16.mxu0 0
        %521 = vmatpush1.bf16.msra.mxu0 0
        %522 = vmatprep.subr.bf16.mxu0 0
        %523 = vmatpush1.bf16.msra.mxu0 0
        %524 = vmatprep.subr.bf16.mxu0 0
        %525 = vmatpush1.bf16.msra.mxu0 %v508
        %526 = vmatprep.subr.bf16.mxu0 0
        %527 = vmatpush1.bf16.msra.mxu0 %v507
        %528 = vmatprep.subr.bf16.mxu0 0
        %529 = vmatpush1.bf16.msra.mxu0 %v506
        %530 = vmatprep.subr.bf16.mxu0 0
        %531 = vmatpush1.bf16.msra.mxu0 %v505
        %532 = vmatprep.subr.bf16.mxu0 0
        %533 = vmatpush2.bf16.msra.mxu0 0
        %534 = vmatprep.subr.bf16.mxu0 0
        %535 = vmatpush2.bf16.msra.mxu0 0
        %536 = vmatprep.subr.bf16.mxu0 0
        %537 = vmatpush2.bf16.msra.mxu0 0
        %538 = vmatprep.subr.bf16.mxu0 0
        %539 = vmatpush2.bf16.msra.mxu0 0
        %540 = vmatprep.subr.bf16.mxu0 0
        %541 = vmatpush2.bf16.msra.mxu0 0
        %542 = vmatprep.subr.bf16.mxu0 0
        %543 = vmatpush2.bf16.msra.mxu0 0
        %544 = vmatprep.subr.bf16.mxu0 0
        %545 = vmatpush2.bf16.msra.mxu0 0
        %546 = vmatprep.subr.bf16.mxu0 0
        %547 = vmatpush2.bf16.msra.mxu0 0
        %548 = vmatprep.mubr.bf16.mxu0 0
        %549 = vmatmul.mubr.bf16.gmra.mxu0 %v514
        %v550 = vpop.f32.mrf.mxu0
        %v551 = vadd.f32 0.0, %v550
        %v552 = vpop.f32.mrf.mxu0
        %v553 = vpop.f32.mrf.mxu0
        %v554 = vadd.f32 0.0, %v553
        %v555 = vpop.f32.mrf.mxu0
        %556 = vdwg.mxu0
        %v557 = vadd.f32 %v470, %v551
        %v558 = vadd.f32 %v473, %v554
        %v559 = vld [vmem:[%s2] sm:$0x1]
        %v561 = vlaneseq
        %v562 = vshrl.u32 %v561, 7
        %v563 = vsub.s32 0, %v562
        %v564 = vrot.slane %v559, %v563
        %v566 = vadd.f32 %v557, %v564
        %v567 = vadd.f32 %v558, %v564
        %v568 = vpack.c.bf16 %v567, %v566
        %v570 = vunpack.c.l.b16 %v568
        %v571 = vunpack.c.h.b16 %v568
        %v572 = vpack.c.b16 %v570, %v570
        %v573 = vpack.c.b16 %v571, %v571
        %576 = vst [vmem:[%s279] sm:$0xf] %v572
        %577 = vst [vmem:[%s279 + $0x4] sm:$0xf] %v573
        %v578 = vadd.f32 %v566, %v567
        %v579 = vrot.slane %v578, 4
        %v580 = vadd.f32 %v578, %v579
        %v581 = vrot.slane %v580, 2
        %v582 = vadd.f32 %v580, %v581
        %v583 = vrot.slane %v582, 1
        %v584 = vadd.f32 %v582, %v583
        %v585 = vmul.f32 %v566, %v566
        %v586 = vmul.f32 %v567, %v567
        %v587 = vadd.f32 %v585, %v586
        %v588 = vrot.slane %v587, 4
        %v589 = vadd.f32 %v587, %v588
        %v590 = vrot.slane %v589, 2
        %v591 = vadd.f32 %v589, %v590
        %v592 = vrot.slane %v591, 1
        %v593 = vadd.f32 %v591, %v592
        %vm594 = vcmask 1040384
        %v595 = vsel %vm594, %v584, %v593
        %596 = vst [vmem:[%s286] sm:$0x3] %v595
        %s597 = sand.u32 %s157, 1
        %s598 = scalar_lea.sflag [#allocation4], %s597
        %s599 = sand.u32 %s157, 1
        %s600 = smul.addr %s599, 8
        %s601 = scalar_lea.vmem [#allocation5], %s600
        %s602 = sand.u32 %s185, 1
        %s603 = scalar_lea.sflag [#allocation7], %s602
        %s604 = sand.u32 %s185, 1
        %s605 = smul.addr %s604, 2
        %s606 = scalar_lea.vmem [#allocation6], %s605
        // Predicated region
        $region45: #{tpu_custom_call.1} parent=39 // pred_check
          %p607 = pneg %p167
        $region46: #{tpu_custom_call.1} parent=39 // pred_check_branch
          %609 = sbr.rel (%p607) target = $region48
        $region47: #{tpu_custom_call.1} parent=39 // pred_region
          %s610 = smul.u32 2, %s30
          %s612 = ssub.s32 128, 128
          %613 = vsyncadd %s598, %s612
          %s614 = smul.addr %s29, 2
          %s615 = sadd.s32 %s610, %s614
          %s616 = smul.addr %s615, 64
          %s617 = scalar_lea.hbm %s5, %s616
          %s618 = sshll.u32 %s601, 4
          %s619 = int_to_ptr.vmem [resolvable:$true] %s618
          %624 = dma.vmem_to_hbm [thread:$0]  %s619, 128, %s617, %s598, 64, 64, 4
        $region48: #{tpu_custom_call.1} parent=39 // pred_fallthru
          _
        // Predicated region
        $region49: #{tpu_custom_call.1} parent=39 // pred_check
          %p625 = pneg %p195
        $region50: #{tpu_custom_call.1} parent=39 // pred_check_branch
          %627 = sbr.rel (%p625) target = $region52
        $region51: #{tpu_custom_call.1} parent=39 // pred_region
          %s629 = ssub.s32 32, 32
          %630 = vsyncadd %s603, %s629
          %s631 = sadd.s32 %s30, %s29
          %s632 = smul.addr %s631, 32
          %s633 = scalar_lea.hbm %s6, %s632
          %s635 = sshll.u32 %s606, 4
          %s636 = int_to_ptr.vmem [resolvable:$true] %s635
          %638 = dma.vmem_to_hbm [thread:$0]  %s636, 32, %s633, %s603
        $region52: #{tpu_custom_call.1} parent=39 // pred_fallthru
          _
      $region40: #{tpu_custom_call.1} parent=5 // pred_fallthru
        _
      %p639 = scmp.le.s32.totalorder 2, %s20
      // Predicated region
      $region53: #{tpu_custom_call.1} parent=5 // pred_check
        %p640 = pneg %p639
      $region54: #{tpu_custom_call.1} parent=5 // pred_check_branch
        %642 = sbr.rel (%p640) target = $region56
      $region55: #{tpu_custom_call.1} parent=5 // pred_region
        %s643 = ssub.s32 %s20, 2
        // Predicated region
        $region57: #{tpu_custom_call.1} parent=55 // pred_check
          %p644 = pneg %p173
        $region58: #{tpu_custom_call.1} parent=55 // pred_check_branch
          %646 = sbr.rel (%p644) target = $region60
        $region59: #{tpu_custom_call.1} parent=55 // pred_region
          %s647 = sand.u32 %s158, 1
          %s648 = scalar_lea.sflag [#allocation4], %s647
          %s649 = sand.u32 %s158, 1
          %s650 = smul.addr %s649, 8
          %s651 = scalar_lea.vmem [#allocation5], %s650
          %652 = dma.done %s648, 128
        $region60: #{tpu_custom_call.1} parent=55 // pred_fallthru
          _
        // Predicated region
        $region61: #{tpu_custom_call.1} parent=55 // pred_check
          %p653 = pneg %p201
        $region62: #{tpu_custom_call.1} parent=55 // pred_check_branch
          %655 = sbr.rel (%p653) target = $region64
        $region63: #{tpu_custom_call.1} parent=55 // pred_region
          %s656 = sand.u32 %s186, 1
          %s657 = scalar_lea.sflag [#allocation7], %s656
          %s658 = sand.u32 %s186, 1
          %s659 = smul.addr %s658, 2
          %s660 = scalar_lea.vmem [#allocation6], %s659
          %661 = dma.done %s657, 32
        $region64: #{tpu_custom_call.1} parent=55 // pred_fallthru
          _
      $region56: #{tpu_custom_call.1} parent=5 // pred_fallthru
        _
    $region6: #{tpu_custom_call.1} parent=1 // loop_footer
      %s24 = sadd.s32 1, %s20
    $region7: #{tpu_custom_call.1} parent=1 // loop_footer_branch
      %19 = sbr.rel target = $region3
    $region8: #{tpu_custom_call.1} parent=1 // loop_exit
      _
    %662 = vsyncpa [#allocation3], 1
    %s663 = scalar_lea.sflag [#allocation3], 1
    %664 = vsyncpa %s663, 1
    %665 = vsyncpa [#allocation4], 1
    %s666 = scalar_lea.sflag [#allocation4], 1
    %667 = vsyncpa %s666, 1
    %668 = vsyncpa [#allocation7], 1
    %s669 = scalar_lea.sflag [#allocation7], 1
    %670 = vsyncpa %s669, 1

</llo_original>
